<compile_context>
chip_gen: v7x
topology: tpu7x:2x2x1
jax: 0.10.0
libtpu: 0.0.40
codegen_flags: <defaults>
</compile_context>

<pallas_src>
import functools

import jax
import jax.numpy as jnp
from jax.experimental import pallas as pl
from jax.experimental.pallas import tpu as pltpu


def _round_up(n, m):
    return ((n + m - 1) // m) * m


def mlp_kernel(x_ref, w0_ref, b0_ref, w1_ref, b1_ref, o_ref):
    # x_ref : (1, TB)   batch on lanes (lane-dense)
    # w0_ref: (HP, 1)   layer-0 weight column (padded hidden on sublanes)
    # b0_ref: (HP, 1)   layer-0 bias column
    # w1_ref: (HP, 1)   layer-1 weight column
    # b1_ref: (1, 1)    layer-1 bias scalar (SMEM)
    # o_ref : (1, TB)   lane-dense output
    x = x_ref[...]
    # Layer 0: outer product (HP,1)*(1,TB) + bias, ReLU.  Pure VPU, no MXU.
    h = jnp.maximum(w0_ref[...] * x + b0_ref[...], 0.0)          # (HP, TB)
    # Layer 1: weighted sum over the padded hidden axis (padded rows have zero weight,
    # so they contribute nothing).  Cross-sublane reduce -> lane-dense (1, TB).
    y = jnp.sum(h * w1_ref[...], axis=0, keepdims=True)          # (1, TB)
    o_ref[...] = (y + b1_ref[0, 0]).astype(o_ref.dtype)


@functools.partial(jax.jit, static_argnames=("tb",))
def mlp_forward(x, w0, b0, w1, b1, *, tb=512):
    """Forward pass of MLP(inputs=1, hidden_layers=[100], outputs=1, activation='relu').

    x : (B, 1); w0: (1, hidden); b0: (1, hidden); w1: (hidden, 1); b1: (1, 1)
    (w = torch_weight.T, i.e. y = x @ w + b -- nn.Linear semantics.)  Returns (B, 1) f32.
    """
    B = x.shape[0]
    hidden = w0.shape[1]
    assert x.shape[1] == 1 and w0.shape[0] == 1 and w1.shape[1] == 1, (
        "kernel is specialized to inputs=1 / outputs=1 (the module defaults)")

    HP = _round_up(hidden, 128)            # lane/sublane-dense hidden (100 -> 128)
    # Batch tiling: one tile if B is small, otherwise 128-multiple tiles on a parallel grid.
    if B <= tb:
        B_pad = _round_up(B, 128)
        TB = B_pad
    else:
        TB = _round_up(tb, 128)
        B_pad = _round_up(B, TB)

    f32 = jnp.float32
    # Re-layout in the wrapper (zero-padding -> exact results after slicing):
    x_row = jnp.pad(x.astype(f32).reshape(1, B), ((0, 0), (0, B_pad - B)))
    w0_col = jnp.pad(w0.astype(f32).reshape(hidden, 1), ((0, HP - hidden), (0, 0)))
    b0_col = jnp.pad(b0.astype(f32).reshape(hidden, 1), ((0, HP - hidden), (0, 0)))
    w1_col = jnp.pad(w1.astype(f32).reshape(hidden, 1), ((0, HP - hidden), (0, 0)))
    b1_s = b1.astype(f32).reshape(1, 1)

    const = lambda shape: pl.BlockSpec(shape, lambda i: (0, 0))   # stays VMEM-resident
    out = pl.pallas_call(
        mlp_kernel,
        out_shape=jax.ShapeDtypeStruct((1, B_pad), f32),
        grid_spec=pltpu.PrefetchScalarGridSpec(
            num_scalar_prefetch=0,
            grid=(B_pad // TB,),
            in_specs=[
                pl.BlockSpec((1, TB), lambda i: (0, i)),             # x, lane-dense
                const((HP, 1)),                                      # w0
                const((HP, 1)),                                      # b0
                const((HP, 1)),                                      # w1
                pl.BlockSpec(memory_space=pltpu.MemorySpace.SMEM),   # b1 scalar
            ],
            out_specs=pl.BlockSpec((1, TB), lambda i: (0, i)),       # lane-dense output
        ),
        compiler_params=pltpu.CompilerParams(
            dimension_semantics=("parallel",)),
    )(x_row, w0_col, b0_col, w1_col, b1_s)
    return out[0, :B].reshape(B, 1)


def init_linear_params(key, fan_in, fan_out):
    """Deterministic init mimicking PyTorch nn.Linear: U(-1/sqrt(fan_in), 1/sqrt(fan_in))."""
    k_w, k_b = jax.random.split(key)
    bound = 1.0 / jnp.sqrt(jnp.float32(fan_in))
    w = jax.random.uniform(k_w, (fan_in, fan_out), jnp.float32, -bound, bound)
    b = jax.random.uniform(k_b, (1, fan_out), jnp.float32, -bound, bound)
    return w, b


def mlp_reference(x, w0, b0, w1, b1):
    h = jnp.maximum(x @ w0 + b0, 0.0)
    return h @ w1 + b1


if __name__ == "__main__":
    key = jax.random.PRNGKey(0)
    k_x, k_l0, k_l1 = jax.random.split(key, 3)

    inputs, hidden, outputs = 1, 100, 1
    batch = 8

    x = jax.random.normal(k_x, (batch, inputs), jnp.float32)
    w0, b0 = init_linear_params(k_l0, inputs, hidden)
    w1, b1 = init_linear_params(k_l1, hidden, outputs)

    out = mlp_forward(x, w0, b0, w1, b1)
    jax.block_until_ready(out)

    ref = mlp_reference(x, w0, b0, w1, b1)
    assert out.shape == (batch, outputs)
    assert jnp.allclose(out, ref, atol=1e-5, rtol=1e-5)

    # Also exercise the multi-tile, pipelined path (grid > 1, parallel batch axis).
    xb = jax.random.normal(k_x, (1536, inputs), jnp.float32)
    outb = mlp_forward(xb, w0, b0, w1, b1)
    jax.block_until_ready(outb)
    refb = mlp_reference(xb, w0, b0, w1, b1)
    assert outb.shape == (1536, outputs)
    assert jnp.allclose(outb, refb, atol=1e-5, rtol=1e-5)

    print("KERNEL_OK")
</pallas_src>

<mosaic_0001>
module attributes {stable_mosaic.version = 11 : i64} {
  func.func @mlp_kernel(%arg0: i32, %arg1: memref<1x128xf32, #tpu.memory_space<vmem>>, %arg2: memref<128x1xf32, #tpu.memory_space<vmem>>, %arg3: memref<128x1xf32, #tpu.memory_space<vmem>>, %arg4: memref<128x1xf32, #tpu.memory_space<vmem>>, %arg5: memref<1x1xf32, #tpu.memory_space<smem>>, %arg6: memref<1x128xf32, #tpu.memory_space<vmem>>) attributes {dimension_semantics = [#tpu.dimension_semantics<parallel>], iteration_bounds = array<i64: 1>, scalar_prefetch = 0 : i64, scratch_operands = 0 : i64, tpu.core_type = #tpu.core_type<tc>, window_params = [{transform_indices = @transform_0, window_bounds = array<i64: 1, 128>}, {pipeline_mode = #tpu.pipeline_mode<synchronous>, transform_indices = @transform_1, window_bounds = array<i64: 128, 1>}, {pipeline_mode = #tpu.pipeline_mode<synchronous>, transform_indices = @transform_2, window_bounds = array<i64: 128, 1>}, {pipeline_mode = #tpu.pipeline_mode<synchronous>, transform_indices = @transform_3, window_bounds = array<i64: 128, 1>}, {transform_indices = @transform_4, window_bounds = array<i64: 1, 1>}, {transform_indices = @transform_5, window_bounds = array<i64: 1, 128>}]} {
    %c0 = arith.constant 0 : index
    %c0_0 = arith.constant 0 : index
    %0 = vector.load %arg1[%c0, %c0_0] : memref<1x128xf32, #tpu.memory_space<vmem>>, vector<1x128xf32>
    %c0_1 = arith.constant 0 : index
    %c0_2 = arith.constant 0 : index
    %1 = vector.load %arg2[%c0_1, %c0_2] : memref<128x1xf32, #tpu.memory_space<vmem>>, vector<128x1xf32>
    %2 = vector.broadcast %1 : vector<128x1xf32> to vector<128x128xf32>
    %3 = vector.broadcast %0 : vector<1x128xf32> to vector<128x128xf32>
    %4 = arith.mulf %2, %3 : vector<128x128xf32>
    %c0_3 = arith.constant 0 : index
    %c0_4 = arith.constant 0 : index
    %5 = vector.load %arg3[%c0_3, %c0_4] : memref<128x1xf32, #tpu.memory_space<vmem>>, vector<128x1xf32>
    %6 = vector.broadcast %5 : vector<128x1xf32> to vector<128x128xf32>
    %7 = arith.addf %4, %6 : vector<128x128xf32>
    %cst = arith.constant 0.000000e+00 : f32
    %8 = vector.broadcast %cst : f32 to vector<128x128xf32>
    %9 = arith.maximumf %7, %8 : vector<128x128xf32>
    %c0_5 = arith.constant 0 : index
    %c0_6 = arith.constant 0 : index
    %10 = vector.load %arg4[%c0_5, %c0_6] : memref<128x1xf32, #tpu.memory_space<vmem>>, vector<128x1xf32>
    %11 = vector.broadcast %10 : vector<128x1xf32> to vector<128x128xf32>
    %12 = arith.mulf %9, %11 : vector<128x128xf32>
    %cst_7 = arith.constant dense<0.000000e+00> : vector<128xf32>
    %13 = vector.multi_reduction <add>, %12, %cst_7 [0] : vector<128x128xf32> to vector<128xf32>
    %14 = vector.shape_cast %13 : vector<128xf32> to vector<1x128xf32>
    %c0_8 = arith.constant 0 : index
    %c0_9 = arith.constant 0 : index
    %15 = memref.load %arg5[%c0_8, %c0_9] : memref<1x1xf32, #tpu.memory_space<smem>>
    %16 = vector.broadcast %15 : f32 to vector<1x128xf32>
    %17 = arith.addf %14, %16 : vector<1x128xf32>
    %c0_10 = arith.constant 0 : index
    %c0_11 = arith.constant 0 : index
    %18 = vector.load %arg6[%c0_10, %c0_11] : memref<1x128xf32, #tpu.memory_space<vmem>>, vector<1x128xf32>
    tpu.vector_store %arg6[%c0_10, %c0_11], %17 {strides = array<i32>} : memref<1x128xf32, #tpu.memory_space<vmem>>, vector<1x128xf32>,
    return
  }
  func.func @transform_0(%arg0: i32) -> (i32, i32) {
    %c0_i32 = arith.constant 0 : i32
    %c0_i32_0 = arith.constant 0 : i32
    return %c0_i32, %arg0 : i32, i32
  }
  func.func @transform_1(%arg0: i32) -> (i32, i32) {
    %c0_i32 = arith.constant 0 : i32
    %c0_i32_0 = arith.constant 0 : i32
    %c0_i32_1 = arith.constant 0 : i32
    return %c0_i32, %c0_i32_0 : i32, i32
  }
  func.func @transform_2(%arg0: i32) -> (i32, i32) {
    %c0_i32 = arith.constant 0 : i32
    %c0_i32_0 = arith.constant 0 : i32
    %c0_i32_1 = arith.constant 0 : i32
    return %c0_i32, %c0_i32_0 : i32, i32
  }
  func.func @transform_3(%arg0: i32) -> (i32, i32) {
    %c0_i32 = arith.constant 0 : i32
    %c0_i32_0 = arith.constant 0 : i32
    %c0_i32_1 = arith.constant 0 : i32
    return %c0_i32, %c0_i32_0 : i32, i32
  }
  func.func @transform_4(%arg0: i32) -> (i32, i32) {
    %c0_i32 = arith.constant 0 : i32
    %c0_i32_0 = arith.constant 0 : i32
    %c0_i32_1 = arith.constant 0 : i32
    return %c0_i32, %c0_i32_0 : i32, i32
  }
  func.func @transform_5(%arg0: i32) -> (i32, i32) {
    %c0_i32 = arith.constant 0 : i32
    %c0_i32_0 = arith.constant 0 : i32
    return %c0_i32, %arg0 : i32, i32
  }
}

</mosaic_0001>

<llo_original>
// kernel: mlp_forward.1
$region0: #{mlp_forward.1}
  #allocation0 [shape = 'u32[]', space=smem, size = 0x4, offset = 0x4, fixed_abs, tag = 'smem constant byte address 0x4 - core index']
  #allocation1 [shape = 'u32[144,128]{1,0:T(1,128)}', space=vmem, size = 0x12000, scoped, tag = 'internal scratch']
  #allocation2 [shape = 'f32[1,1]{1,0:T(1,128)S(6)}', space=smem, size = 0x200, scoped, tag = 'scoped memory for mlp_forward.1']
  %s0 = inlined_call_operand.vmem [shape: f32[1,128], index: 0, kind: input, shape index: {}]
  %s1 = inlined_call_operand.vmem [shape: f32[128,1], index: 1, kind: input, shape index: {}]
  %s2 = inlined_call_operand.vmem [shape: f32[128,1], index: 2, kind: input, shape index: {}]
  %s3 = inlined_call_operand.vmem [shape: f32[128,1], index: 3, kind: input, shape index: {}]
  %s4 = inlined_call_operand.<no memory space> [shape: f32[1,1], index: 4, kind: input, shape index: {}]
  %s5 = inlined_call_operand.vmem [shape: f32[1,128], index: 5, kind: output, shape index: {}]
  %s6 = sld [smem:[#allocation0]]
  $region30: #{mlp_forward.1} parent=0
    _
  %s8 = ssub.s32 1, %s6
  %s9 = scalar_select 0, %s8, %s6
  %10 = sst [smem:[#allocation2]] %s4
  // Predicated region
  $region2: #{mlp_forward.1} parent=0 // pred_check
    _
  $region3: #{mlp_forward.1} parent=0 // pred_check_branch
    %12 = sbr.rel (0) target = $region5
  $region4: #{mlp_forward.1} parent=0 // pred_region
    _
  $region5: #{mlp_forward.1} parent=0 // pred_fallthru
    _
  // Predicated region
  $region6: #{mlp_forward.1} parent=0 // pred_check
    _
  $region7: #{mlp_forward.1} parent=0 // pred_check_branch
    %14 = sbr.rel (0) target = $region9
  $region8: #{mlp_forward.1} parent=0 // pred_region
    _
  $region9: #{mlp_forward.1} parent=0 // pred_fallthru
    _
  // Predicated region
  $region10: #{mlp_forward.1} parent=0 // pred_check
    _
  $region11: #{mlp_forward.1} parent=0 // pred_check_branch
    %16 = sbr.rel (0) target = $region13
  $region12: #{mlp_forward.1} parent=0 // pred_region
    _
  $region13: #{mlp_forward.1} parent=0 // pred_fallthru
    _
  // Predicated region
  $region14: #{mlp_forward.1} parent=0 // pred_check
    _
  $region15: #{mlp_forward.1} parent=0 // pred_check_branch
    %18 = sbr.rel (0) target = $region17
  $region16: #{mlp_forward.1} parent=0 // pred_region
    _
  $region17: #{mlp_forward.1} parent=0 // pred_fallthru
    _
  // Predicated region
  $region18: #{mlp_forward.1} parent=0 // pred_check
    _
  $region19: #{mlp_forward.1} parent=0 // pred_check_branch
    %20 = sbr.rel (0) target = $region21
  $region20: #{mlp_forward.1} parent=0 // pred_region
    _
  $region21: #{mlp_forward.1} parent=0 // pred_fallthru
    _
  %v21 = vld [vmem:[%s0] sm:$0x1]
  %v22 = vld [vmem:[%s1] sm:$0xff]
  %v23 = vld [vmem:[%s1 + $0x8] sm:$0xff]
  %v24 = vld [vmem:[%s1 + $0x10] sm:$0xff]
  %v25 = vld [vmem:[%s1 + $0x18] sm:$0xff]
  %v26 = vld [vmem:[%s1 + $0x20] sm:$0xff]
  %v27 = vld [vmem:[%s1 + $0x28] sm:$0xff]
  %v28 = vld [vmem:[%s1 + $0x30] sm:$0xff]
  %v29 = vld [vmem:[%s1 + $0x38] sm:$0xff]
  %v30 = vld [vmem:[%s1 + $0x40] sm:$0xff]
  %v31 = vld [vmem:[%s1 + $0x48] sm:$0xff]
  %v32 = vld [vmem:[%s1 + $0x50] sm:$0xff]
  %v33 = vld [vmem:[%s1 + $0x58] sm:$0xff]
  %v34 = vld [vmem:[%s1 + $0x60] sm:$0xff]
  %v35 = vld [vmem:[%s1 + $0x68] sm:$0xff]
  %v36 = vld [vmem:[%s1 + $0x70] sm:$0xff]
  %v37 = vld [vmem:[%s1 + $0x78] sm:$0xff]
  %39 = vset.pattern.permute.xlu0 0
  %40 = vperm.xlu0 %39, %v22
  %v41 = vpop.permute.xlu0 %40
  %44 = vset.pattern.permute.xlu0 0
  %45 = vperm.xlu0 %44, %v23
  %v46 = vpop.permute.xlu0 %45
  %49 = vset.pattern.permute.xlu0 0
  %50 = vperm.xlu0 %49, %v24
  %v51 = vpop.permute.xlu0 %50
  %54 = vset.pattern.permute.xlu0 0
  %55 = vperm.xlu0 %54, %v25
  %v56 = vpop.permute.xlu0 %55
  %59 = vset.pattern.permute.xlu0 0
  %60 = vperm.xlu0 %59, %v26
  %v61 = vpop.permute.xlu0 %60
  %64 = vset.pattern.permute.xlu0 0
  %65 = vperm.xlu0 %64, %v27
  %v66 = vpop.permute.xlu0 %65
  %69 = vset.pattern.permute.xlu0 0
  %70 = vperm.xlu0 %69, %v28
  %v71 = vpop.permute.xlu0 %70
  %74 = vset.pattern.permute.xlu0 0
  %75 = vperm.xlu0 %74, %v29
  %v76 = vpop.permute.xlu0 %75
  %79 = vset.pattern.permute.xlu0 0
  %80 = vperm.xlu0 %79, %v30
  %v81 = vpop.permute.xlu0 %80
  %84 = vset.pattern.permute.xlu0 0
  %85 = vperm.xlu0 %84, %v31
  %v86 = vpop.permute.xlu0 %85
  %89 = vset.pattern.permute.xlu0 0
  %90 = vperm.xlu0 %89, %v32
  %v91 = vpop.permute.xlu0 %90
  %94 = vset.pattern.permute.xlu0 0
  %95 = vperm.xlu0 %94, %v33
  %v96 = vpop.permute.xlu0 %95
  %99 = vset.pattern.permute.xlu0 0
  %100 = vperm.xlu0 %99, %v34
  %v101 = vpop.permute.xlu0 %100
  %104 = vset.pattern.permute.xlu0 0
  %105 = vperm.xlu0 %104, %v35
  %v106 = vpop.permute.xlu0 %105
  %109 = vset.pattern.permute.xlu0 0
  %110 = vperm.xlu0 %109, %v36
  %v111 = vpop.permute.xlu0 %110
  %114 = vset.pattern.permute.xlu0 0
  %115 = vperm.xlu0 %114, %v37
  %v116 = vpop.permute.xlu0 %115
  %v119 = vlaneseq
  %v120 = vshrl.u32 %v119, 7
  %v121 = vsub.s32 0, %v120
  %v122 = vrot.slane %v21, %v121
  %v124 = vmul.f32 %v41, %v122
  %v125 = vmul.f32 %v46, %v122
  %v126 = vmul.f32 %v51, %v122
  %v127 = vmul.f32 %v56, %v122
  %v128 = vmul.f32 %v61, %v122
  %v129 = vmul.f32 %v66, %v122
  %v130 = vmul.f32 %v71, %v122
  %v131 = vmul.f32 %v76, %v122
  %v132 = vmul.f32 %v81, %v122
  %v133 = vmul.f32 %v86, %v122
  %v134 = vmul.f32 %v91, %v122
  %v135 = vmul.f32 %v96, %v122
  %v136 = vmul.f32 %v101, %v122
  %v137 = vmul.f32 %v106, %v122
  %v138 = vmul.f32 %v111, %v122
  %v139 = vmul.f32 %v116, %v122
  %v140 = vld [vmem:[%s2] sm:$0xff]
  %v141 = vld [vmem:[%s2 + $0x8] sm:$0xff]
  %v142 = vld [vmem:[%s2 + $0x10] sm:$0xff]
  %v143 = vld [vmem:[%s2 + $0x18] sm:$0xff]
  %v144 = vld [vmem:[%s2 + $0x20] sm:$0xff]
  %v145 = vld [vmem:[%s2 + $0x28] sm:$0xff]
  %v146 = vld [vmem:[%s2 + $0x30] sm:$0xff]
  %v147 = vld [vmem:[%s2 + $0x38] sm:$0xff]
  %v148 = vld [vmem:[%s2 + $0x40] sm:$0xff]
  %v149 = vld [vmem:[%s2 + $0x48] sm:$0xff]
  %v150 = vld [vmem:[%s2 + $0x50] sm:$0xff]
  %v151 = vld [vmem:[%s2 + $0x58] sm:$0xff]
  %v152 = vld [vmem:[%s2 + $0x60] sm:$0xff]
  %v153 = vld [vmem:[%s2 + $0x68] sm:$0xff]
  %v154 = vld [vmem:[%s2 + $0x70] sm:$0xff]
  %v155 = vld [vmem:[%s2 + $0x78] sm:$0xff]
  %157 = vset.pattern.permute.xlu0 0
  %158 = vperm.xlu0 %157, %v140
  %v159 = vpop.permute.xlu0 %158
  %162 = vset.pattern.permute.xlu0 0
  %163 = vperm.xlu0 %162, %v141
  %v164 = vpop.permute.xlu0 %163
  %167 = vset.pattern.permute.xlu0 0
  %168 = vperm.xlu0 %167, %v142
  %v169 = vpop.permute.xlu0 %168
  %172 = vset.pattern.permute.xlu0 0
  %173 = vperm.xlu0 %172, %v143
  %v174 = vpop.permute.xlu0 %173
  %177 = vset.pattern.permute.xlu0 0
  %178 = vperm.xlu0 %177, %v144
  %v179 = vpop.permute.xlu0 %178
  %182 = vset.pattern.permute.xlu0 0
  %183 = vperm.xlu0 %182, %v145
  %v184 = vpop.permute.xlu0 %183
  %187 = vset.pattern.permute.xlu0 0
  %188 = vperm.xlu0 %187, %v146
  %v189 = vpop.permute.xlu0 %188
  %192 = vset.pattern.permute.xlu0 0
  %193 = vperm.xlu0 %192, %v147
  %v194 = vpop.permute.xlu0 %193
  %197 = vset.pattern.permute.xlu0 0
  %198 = vperm.xlu0 %197, %v148
  %v199 = vpop.permute.xlu0 %198
  %202 = vset.pattern.permute.xlu0 0
  %203 = vperm.xlu0 %202, %v149
  %v204 = vpop.permute.xlu0 %203
  %207 = vset.pattern.permute.xlu0 0
  %208 = vperm.xlu0 %207, %v150
  %v209 = vpop.permute.xlu0 %208
  %212 = vset.pattern.permute.xlu0 0
  %213 = vperm.xlu0 %212, %v151
  %v214 = vpop.permute.xlu0 %213
  %217 = vset.pattern.permute.xlu0 0
  %218 = vperm.xlu0 %217, %v152
  %v219 = vpop.permute.xlu0 %218
  %222 = vset.pattern.permute.xlu0 0
  %223 = vperm.xlu0 %222, %v153
  %v224 = vpop.permute.xlu0 %223
  %227 = vset.pattern.permute.xlu0 0
  %228 = vperm.xlu0 %227, %v154
  %v229 = vpop.permute.xlu0 %228
  %232 = vset.pattern.permute.xlu0 0
  %233 = vperm.xlu0 %232, %v155
  %v234 = vpop.permute.xlu0 %233
  %v236 = vadd.f32 %v124, %v159
  %v237 = vadd.f32 %v125, %v164
  %v238 = vadd.f32 %v126, %v169
  %v239 = vadd.f32 %v127, %v174
  %v240 = vadd.f32 %v128, %v179
  %v241 = vadd.f32 %v129, %v184
  %v242 = vadd.f32 %v130, %v189
  %v243 = vadd.f32 %v131, %v194
  %v244 = vadd.f32 %v132, %v199
  %v245 = vadd.f32 %v133, %v204
  %v246 = vadd.f32 %v134, %v209
  %v247 = vadd.f32 %v135, %v214
  %v248 = vadd.f32 %v136, %v219
  %v249 = vadd.f32 %v137, %v224
  %v250 = vadd.f32 %v138, %v229
  %v251 = vadd.f32 %v139, %v234
  %v252 = vmax.f32 %v236, 0.0
  %v253 = vmax.f32 %v237, 0.0
  %v254 = vmax.f32 %v238, 0.0
  %v255 = vmax.f32 %v239, 0.0
  %v256 = vmax.f32 %v240, 0.0
  %v257 = vmax.f32 %v241, 0.0
  %v258 = vmax.f32 %v242, 0.0
  %v259 = vmax.f32 %v243, 0.0
  %v260 = vmax.f32 %v244, 0.0
  %v261 = vmax.f32 %v245, 0.0
  %v262 = vmax.f32 %v246, 0.0
  %v263 = vmax.f32 %v247, 0.0
  %v264 = vmax.f32 %v248, 0.0
  %v265 = vmax.f32 %v249, 0.0
  %v266 = vmax.f32 %v250, 0.0
  %v267 = vmax.f32 %v251, 0.0
  %v268 = vld [vmem:[%s3] sm:$0xff]
  %v269 = vld [vmem:[%s3 + $0x8] sm:$0xff]
  %v270 = vld [vmem:[%s3 + $0x10] sm:$0xff]
  %v271 = vld [vmem:[%s3 + $0x18] sm:$0xff]
  %v272 = vld [vmem:[%s3 + $0x20] sm:$0xff]
  %v273 = vld [vmem:[%s3 + $0x28] sm:$0xff]
  %v274 = vld [vmem:[%s3 + $0x30] sm:$0xff]
  %v275 = vld [vmem:[%s3 + $0x38] sm:$0xff]
  %v276 = vld [vmem:[%s3 + $0x40] sm:$0xff]
  %v277 = vld [vmem:[%s3 + $0x48] sm:$0xff]
  %v278 = vld [vmem:[%s3 + $0x50] sm:$0xff]
  %v279 = vld [vmem:[%s3 + $0x58] sm:$0xff]
  %v280 = vld [vmem:[%s3 + $0x60] sm:$0xff]
  %v281 = vld [vmem:[%s3 + $0x68] sm:$0xff]
  %v282 = vld [vmem:[%s3 + $0x70] sm:$0xff]
  %v283 = vld [vmem:[%s3 + $0x78] sm:$0xff]
  %285 = vset.pattern.permute.xlu0 0
  %286 = vperm.xlu0 %285, %v268
  %v287 = vpop.permute.xlu0 %286
  %290 = vset.pattern.permute.xlu0 0
  %291 = vperm.xlu0 %290, %v269
  %v292 = vpop.permute.xlu0 %291
  %295 = vset.pattern.permute.xlu0 0
  %296 = vperm.xlu0 %295, %v270
  %v297 = vpop.permute.xlu0 %296
  %300 = vset.pattern.permute.xlu0 0
  %301 = vperm.xlu0 %300, %v271
  %v302 = vpop.permute.xlu0 %301
  %305 = vset.pattern.permute.xlu0 0
  %306 = vperm.xlu0 %305, %v272
  %v307 = vpop.permute.xlu0 %306
  %310 = vset.pattern.permute.xlu0 0
  %311 = vperm.xlu0 %310, %v273
  %v312 = vpop.permute.xlu0 %311
  %315 = vset.pattern.permute.xlu0 0
  %316 = vperm.xlu0 %315, %v274
  %v317 = vpop.permute.xlu0 %316
  %320 = vset.pattern.permute.xlu0 0
  %321 = vperm.xlu0 %320, %v275
  %v322 = vpop.permute.xlu0 %321
  %325 = vset.pattern.permute.xlu0 0
  %326 = vperm.xlu0 %325, %v276
  %v327 = vpop.permute.xlu0 %326
  %330 = vset.pattern.permute.xlu0 0
  %331 = vperm.xlu0 %330, %v277
  %v332 = vpop.permute.xlu0 %331
  %335 = vset.pattern.permute.xlu0 0
  %336 = vperm.xlu0 %335, %v278
  %v337 = vpop.permute.xlu0 %336
  %340 = vset.pattern.permute.xlu0 0
  %341 = vperm.xlu0 %340, %v279
  %v342 = vpop.permute.xlu0 %341
  %345 = vset.pattern.permute.xlu0 0
  %346 = vperm.xlu0 %345, %v280
  %v347 = vpop.permute.xlu0 %346
  %350 = vset.pattern.permute.xlu0 0
  %351 = vperm.xlu0 %350, %v281
  %v352 = vpop.permute.xlu0 %351
  %355 = vset.pattern.permute.xlu0 0
  %356 = vperm.xlu0 %355, %v282
  %v357 = vpop.permute.xlu0 %356
  %360 = vset.pattern.permute.xlu0 0
  %361 = vperm.xlu0 %360, %v283
  %v362 = vpop.permute.xlu0 %361
  %v364 = vmul.f32 %v252, %v287
  %v365 = vmul.f32 %v253, %v292
  %v366 = vmul.f32 %v254, %v297
  %v367 = vmul.f32 %v255, %v302
  %v368 = vmul.f32 %v256, %v307
  %v369 = vmul.f32 %v257, %v312
  %v370 = vmul.f32 %v258, %v317
  %v371 = vmul.f32 %v259, %v322
  %v372 = vmul.f32 %v260, %v327
  %v373 = vmul.f32 %v261, %v332
  %v374 = vmul.f32 %v262, %v337
  %v375 = vmul.f32 %v263, %v342
  %v376 = vmul.f32 %v264, %v347
  %v377 = vmul.f32 %v265, %v352
  %v378 = vmul.f32 %v266, %v357
  %v379 = vmul.f32 %v267, %v362
  %v380 = vadd.f32 %v364, %v365
  %v381 = vadd.f32 %v380, %v366
  %v382 = vadd.f32 %v381, %v367
  %v383 = vadd.f32 %v382, %v368
  %v384 = vadd.f32 %v383, %v369
  %v385 = vadd.f32 %v384, %v370
  %v386 = vadd.f32 %v385, %v371
  %v387 = vadd.f32 %v386, %v372
  %v388 = vadd.f32 %v387, %v373
  %v389 = vadd.f32 %v388, %v374
  %v390 = vadd.f32 %v389, %v375
  %v391 = vadd.f32 %v390, %v376
  %v392 = vadd.f32 %v391, %v377
  %v393 = vadd.f32 %v392, %v378
  %v394 = vadd.f32 %v393, %v379
  %v395 = vrot.slane %v394, 4
  %v396 = vadd.f32 %v394, %v395
  %v397 = vrot.slane %v396, 2
  %v398 = vadd.f32 %v396, %v397
  %v399 = vrot.slane %v398, 1
  %v400 = vadd.f32 %v398, %v399
  %s401 = sld [smem:[#allocation2]]
  %v402 = vstv %s401
  %v403 = vadd.f32 %v400, %v402
  %404 = vst [vmem:[%s5] sm:$0x1] %v403
  // Predicated region
  $region22: #{mlp_forward.1} parent=0 // pred_check
    _
  $region23: #{mlp_forward.1} parent=0 // pred_check_branch
    %406 = sbr.rel (0) target = $region25
  $region24: #{mlp_forward.1} parent=0 // pred_region
    _
  $region25: #{mlp_forward.1} parent=0 // pred_fallthru
    _
  // Predicated region
  $region26: #{mlp_forward.1} parent=0 // pred_check
    _
  $region27: #{mlp_forward.1} parent=0 // pred_check_branch
    %408 = sbr.rel (0) target = $region29
  $region28: #{mlp_forward.1} parent=0 // pred_region
    _
  $region29: #{mlp_forward.1} parent=0 // pred_fallthru
    _

</llo_original>
